<compile_context>
chip_gen: v5e
topology: v5e:2x2
jax: 0.10.0
libtpu: 0.0.40
codegen_flags: <defaults>
</compile_context>

<pallas_src>
import functools
import math

import numpy as np
import jax
import jax.numpy as jnp
from jax import lax
from jax.experimental import pallas as pl
from jax.experimental.pallas import tpu as pltpu


def _round_up(n, m):
    return ((n + m - 1) // m) * m


def _choose_tc(T, B):
    """Time-chunk length: whole T if small, else a divisor with (tc*B) % 8 == 0."""
    if T <= 128:
        return T
    for tc in range(128, 0, -1):
        if T % tc == 0 and (tc * B) % 8 == 0:
            return tc
    return T  # fallback: single chunk


def s4d_kernel(x_ref, w_in_ref, w_out_ref, coef_ref, o_ref,
               xp_ref, y_ref, h_ref, *, batch, steps):
    """One time-chunk: in-proj (MXU) -> S4D recurrence (VPU) -> out-proj (MXU).

    x_ref:     (tc*B, Dp)  bf16, time-major rows, features on lanes
    w_in_ref:  (Dp, N2p)   bf16, pre-transposed in-projection
    w_out_ref: (N2p, Dp)   bf16, pre-transposed out-projection
    coef_ref:  (3, N2p)    f32, rows = (Re(lam), Im(lam), gain)
    o_ref:     (tc*B, Dp)  f32
    xp_ref / y_ref: (tc*B, N2p) f32 VMEM scratch
    h_ref:     (2, B, N2p) f32 recurrence state, carried across grid steps
    """
    n2p = coef_ref.shape[1]

    @pl.when(pl.program_id(0) == 0)
    def _():
        h_ref[...] = jnp.zeros_like(h_ref)

    # In-projection on the MXU, all (time, batch) rows of this chunk at once.
    xp_ref[...] = jnp.dot(x_ref[...], w_in_ref[...],
                          preferred_element_type=jnp.float32)

    # Broadcast the per-mode coefficients once (hoisted out of the loop).
    coef = coef_ref[...]
    ar = jnp.broadcast_to(coef[0:1, :], (batch, n2p))
    ai = jnp.broadcast_to(coef[1:2, :], (batch, n2p))
    gn = jnp.broadcast_to(coef[2:3, :], (batch, n2p))

    def step(i, carry):
        h_r, h_i = carry
        r = pl.multiple_of(i * batch, batch)
        u = xp_ref[pl.ds(r, batch), :]                 # (B, N2p)
        new_r = ar * h_r - ai * h_i + u                # Re(lam*h + u)
        new_i = ai * h_r + ar * h_i                    # Im(lam*h + u)
        y_ref[pl.ds(r, batch), :] = gn * new_r
        return (new_r, new_i)

    h_r, h_i = lax.fori_loop(0, steps, step, (h_ref[0], h_ref[1]),
                             unroll=steps <= 16)
    h_ref[0] = h_r
    h_ref[1] = h_i

    # Out-projection on the MXU (bf16 inputs, f32 accumulate).
    o_ref[...] = jnp.dot(y_ref[...].astype(jnp.bfloat16), w_out_ref[...],
                         preferred_element_type=jnp.float32).astype(o_ref.dtype)


def s4d_forward(x, w_in, w_out, log_gain, log_lam_mag, angle):
    """x: (B, T, D) -> (B, T, D); parameters as in the PyTorch module."""
    B, T, D = x.shape
    N2 = w_in.shape[0]
    f32 = jnp.float32
    bf16 = jnp.bfloat16

    # Batch-invariant per-mode recurrence coefficients, hoisted out of the grid.
    mag = jnp.exp(log_lam_mag.astype(f32))
    ar = mag * jnp.cos(angle.astype(f32))
    ai = mag * jnp.sin(angle.astype(f32))
    gain = jnp.exp(log_gain.astype(f32))
    coef = jnp.stack([ar, ai, gain], axis=0)                       # (3, N2)

    # Pad mode / feature dims to lane width (128) -> lane-dense compute/stores.
    N2p = _round_up(N2, 128)
    Dp = _round_up(D, 128)
    coef = jnp.pad(coef, ((0, 0), (0, N2p - N2)))
    w_in_t = jnp.pad(w_in.astype(bf16).T, ((0, Dp - D), (0, N2p - N2)))    # (Dp, N2p)
    w_out_t = jnp.pad(w_out.astype(bf16).T, ((0, N2p - N2), (0, Dp - D)))  # (N2p, Dp)

    # Time-major layout: (B,T,D) -> (T*B, Dp) so batch folds into the matmul M
    # dimension and each recurrence step reads a contiguous (B, N2p) slab.
    x2d = jnp.transpose(x.astype(bf16), (1, 0, 2)).reshape(T * B, D)
    x2d = jnp.pad(x2d, ((0, 0), (0, Dp - D)))

    tc = _choose_tc(T, B)
    n_chunks = T // tc
    rows = tc * B

    kernel = functools.partial(s4d_kernel, batch=B, steps=tc)
    out2d = pl.pallas_call(
        kernel,
        out_shape=jax.ShapeDtypeStruct((T * B, Dp), f32),
        grid_spec=pltpu.PrefetchScalarGridSpec(
            num_scalar_prefetch=0,
            grid=(n_chunks,),
            in_specs=[
                pl.BlockSpec((rows, Dp), lambda c: (c, 0)),    # x time-chunk
                pl.BlockSpec((Dp, N2p), lambda c: (0, 0)),     # W_in^T
                pl.BlockSpec((N2p, Dp), lambda c: (0, 0)),     # W_out^T
                pl.BlockSpec((3, N2p), lambda c: (0, 0)),      # mode coefficients
            ],
            out_specs=pl.BlockSpec((rows, Dp), lambda c: (c, 0)),
            scratch_shapes=[
                pltpu.VMEM((rows, N2p), f32),                  # xp
                pltpu.VMEM((rows, N2p), f32),                  # y
                pltpu.VMEM((2, B, N2p), f32),                  # recurrence state
            ],
        ),
        compiler_params=pltpu.CompilerParams(
            # the time-chunk axis carries the recurrence state -> sequential
            dimension_semantics=("arbitrary",)),
    )(x2d, w_in_t, w_out_t, coef)

    out = out2d[:, :D].reshape(T, B, D)
    return jnp.transpose(out, (1, 0, 2))


# ---------------------------------------------------------------------------
# Pure-numpy reference that mirrors the PyTorch forward exactly (rfft path).
# ---------------------------------------------------------------------------
def _next_pow_two(n):
    return 1 << (int(n) - 1).bit_length()


def ref_forward_np(x, w_in, w_out, log_gain, llm, angle):
    x = np.asarray(x, np.float32)
    Bn, T, _ = x.shape
    N2 = w_in.shape[0]
    xp = x @ np.asarray(w_in, np.float32).T                       # (B,T,N2)
    x_modes = np.concatenate([xp, xp[..., ::-1]], axis=-1)        # (B,T,N)
    L = _next_pow_two(2 * T)
    Uf = np.fft.rfft(x_modes, n=L, axis=1).transpose(0, 2, 1)     # (B,N,L/2+1)
    i = np.arange(T, dtype=np.float32)
    K_half = np.exp(log_gain[:, None] + i[None] * llm[:, None]) * \
        np.cos(i[None] * angle[:, None])                          # (N2,T)
    K_full = np.concatenate([K_half, K_half[::-1]], axis=0)       # (N,T)
    Kf = np.fft.rfft(K_full, n=L, axis=-1)
    Yf = Uf * Kf[None]
    y_modes = np.fft.irfft(Yf, n=L, axis=2)[..., :T]              # (B,N,T)
    y_modes = y_modes.transpose(0, 2, 1)                          # (B,T,N)
    y = y_modes[..., :N2]
    return y @ np.asarray(w_out, np.float32).T                    # (B,T,D)


if __name__ == "__main__":
    # Small shapes consistent with the module: x (B, T, D), N=64 -> N/2=32.
    Bn, T, D, N = 2, 8, 32, 64
    N2 = N // 2
    tau_min = 1e-4

    key = jax.random.PRNGKey(0)
    kx, kwin, kwout, kB, kC = jax.random.split(key, 5)

    # Deterministic parameter init matching the module's __init__/_init_modes.
    log_tau = jnp.full((N2,), math.log(0.5), jnp.float32)
    n_idx = jnp.arange(N2, dtype=jnp.float32)
    freq = math.pi * (2.0 * n_idx + 1.0) / 2.0                    # 'hippoD'
    B_param = 1.0 + 0.2 * jax.random.normal(kB, (N2,), jnp.float32)
    C_param = (1.0 / math.sqrt(N2)) * jax.random.normal(kC, (N2,), jnp.float32)
    log_dt = jnp.zeros((), jnp.float32)
    w_in = jax.random.uniform(kwin, (N2, D), jnp.float32,
                              -1.0 / math.sqrt(D), 1.0 / math.sqrt(D))
    w_out = jax.random.uniform(kwout, (D, N2), jnp.float32,
                               -1.0 / math.sqrt(N2), 1.0 / math.sqrt(N2))

    # Derived per-mode quantities (same as _kernel_fft).
    dt = jnp.exp(log_dt)
    tau = jnp.maximum(jnp.exp(log_tau), tau_min)                   # clamp(min=tau_min)
    angle = freq * dt
    log_lam_mag = -tau * dt                                        # log(exp(-tau*dt))
    log_gain = jnp.log(jnp.abs(B_param) + 1e-9) + jnp.log(jnp.abs(C_param) + 1e-9)

    x = jax.random.normal(kx, (Bn, T, D), jnp.float32)

    out = s4d_forward(x, w_in, w_out, log_gain, log_lam_mag, angle)
    out = jax.block_until_ready(out)

    ref = ref_forward_np(np.asarray(x), np.asarray(w_in), np.asarray(w_out),
                         np.asarray(log_gain), np.asarray(log_lam_mag),
                         np.asarray(angle))
    # bf16 MXU inputs (f32 accumulate) -> bf16-level tolerance vs the f64 FFT ref.
    np.testing.assert_allclose(np.asarray(out), ref, rtol=2e-2, atol=2e-2)

    print("KERNEL_OK")
</pallas_src>

<mosaic_0001>
module attributes {stable_mosaic.version = 11 : i64} {
  func.func @s4d_kernel(%arg0: i32, %arg1: memref<16x128xbf16, #tpu.memory_space<vmem>>, %arg2: memref<128x128xbf16, #tpu.memory_space<vmem>>, %arg3: memref<128x128xbf16, #tpu.memory_space<vmem>>, %arg4: memref<3x128xf32, #tpu.memory_space<vmem>>, %arg5: memref<16x128xf32, #tpu.memory_space<vmem>>, %arg6: memref<16x128xf32, #tpu.memory_space<vmem>>, %arg7: memref<16x128xf32, #tpu.memory_space<vmem>>, %arg8: memref<2x2x128xf32, #tpu.memory_space<vmem>>) attributes {dimension_semantics = [#tpu.dimension_semantics<arbitrary>], iteration_bounds = array<i64: 1>, scalar_prefetch = 0 : i64, scratch_operands = 3 : i64, tpu.core_type = #tpu.core_type<tc>, window_params = [{transform_indices = @transform_0, window_bounds = array<i64: 16, 128>}, {pipeline_mode = #tpu.pipeline_mode<synchronous>, transform_indices = @transform_1, window_bounds = array<i64: 128, 128>}, {pipeline_mode = #tpu.pipeline_mode<synchronous>, transform_indices = @transform_2, window_bounds = array<i64: 128, 128>}, {pipeline_mode = #tpu.pipeline_mode<synchronous>, transform_indices = @transform_3, window_bounds = array<i64: 3, 128>}, {transform_indices = @transform_4, window_bounds = array<i64: 16, 128>}]} {
    %c0_i32 = arith.constant 0 : i32
    %0 = arith.cmpi eq, %arg0, %c0_i32 : i32
    %1 = arith.extui %0 : i1 to i32
    %c0_i32_0 = arith.constant 0 : i32
    %2 = arith.cmpi ne, %1, %c0_i32_0 : i32
    scf.if %2 {
      %cst_51 = arith.constant 0.000000e+00 : f32
      %144 = vector.broadcast %cst_51 : f32 to vector<2x2x128xf32>
      %c0_52 = arith.constant 0 : index
      %c0_53 = arith.constant 0 : index
      %c0_54 = arith.constant 0 : index
      %145 = vector.load %arg8[%c0_52, %c0_53, %c0_54] : memref<2x2x128xf32, #tpu.memory_space<vmem>>, vector<2x2x128xf32>
      tpu.vector_store %arg8[%c0_52, %c0_53, %c0_54], %144 {strides = array<i32>} : memref<2x2x128xf32, #tpu.memory_space<vmem>>, vector<2x2x128xf32>,
    } else {
    }
    %c0 = arith.constant 0 : index
    %c0_1 = arith.constant 0 : index
    %3 = vector.load %arg1[%c0, %c0_1] : memref<16x128xbf16, #tpu.memory_space<vmem>>, vector<16x128xbf16>
    %c0_2 = arith.constant 0 : index
    %c0_3 = arith.constant 0 : index
    %4 = vector.load %arg2[%c0_2, %c0_3] : memref<128x128xbf16, #tpu.memory_space<vmem>>, vector<128x128xbf16>
    %cst = arith.constant dense<0.000000e+00> : vector<16x128xf32>
    %5 = tpu.matmul %3, %4, %cst {dimension_numbers = #tpu.dot_dimension_numbers<[1], [0], [0], [1], [0, 0, 1, 1], [], []>} : vector<16x128xbf16>, vector<128x128xbf16>, vector<16x128xf32> -> vector<16x128xf32>
    %c0_4 = arith.constant 0 : index
    %c0_5 = arith.constant 0 : index
    %6 = vector.load %arg6[%c0_4, %c0_5] : memref<16x128xf32, #tpu.memory_space<vmem>>, vector<16x128xf32>
    tpu.vector_store %arg6[%c0_4, %c0_5], %5 {strides = array<i32>} : memref<16x128xf32, #tpu.memory_space<vmem>>, vector<16x128xf32>,
    %c0_6 = arith.constant 0 : index
    %c0_7 = arith.constant 0 : index
    %7 = vector.load %arg4[%c0_6, %c0_7] : memref<3x128xf32, #tpu.memory_space<vmem>>, vector<3x128xf32>
    %8 = vector.extract_strided_slice %7 {offsets = [0, 0], sizes = [1, 128], strides = [1, 1]} : vector<3x128xf32> to vector<1x128xf32>
    %9 = vector.shape_cast %8 : vector<1x128xf32> to vector<1x128xf32>
    %10 = vector.broadcast %9 : vector<1x128xf32> to vector<2x128xf32>
    %11 = vector.extract_strided_slice %7 {offsets = [1, 0], sizes = [1, 128], strides = [1, 1]} : vector<3x128xf32> to vector<1x128xf32>
    %12 = vector.shape_cast %11 : vector<1x128xf32> to vector<1x128xf32>
    %13 = vector.broadcast %12 : vector<1x128xf32> to vector<2x128xf32>
    %14 = vector.extract_strided_slice %7 {offsets = [2, 0], sizes = [1, 128], strides = [1, 1]} : vector<3x128xf32> to vector<1x128xf32>
    %15 = vector.shape_cast %14 : vector<1x128xf32> to vector<1x128xf32>
    %16 = vector.broadcast %15 : vector<1x128xf32> to vector<2x128xf32>
    %c0_8 = arith.constant 0 : index
    %c0_9 = arith.constant 0 : index
    %c0_10 = arith.constant 0 : index
    %17 = vector.load %arg8[%c0_8, %c0_9, %c0_10] : memref<2x2x128xf32, #tpu.memory_space<vmem>>, vector<1x2x128xf32>
    %18 = vector.shape_cast %17 : vector<1x2x128xf32> to vector<2x128xf32>
    %c1 = arith.constant 1 : index
    %c0_11 = arith.constant 0 : index
    %c0_12 = arith.constant 0 : index
    %19 = vector.load %arg8[%c1, %c0_11, %c0_12] : memref<2x2x128xf32, #tpu.memory_space<vmem>>, vector<1x2x128xf32>
    %20 = vector.shape_cast %19 : vector<1x2x128xf32> to vector<2x128xf32>
    %c0_i32_13 = arith.constant 0 : i32
    %c2_i32 = arith.constant 2 : i32
    %21 = arith.muli %c0_i32_13, %c2_i32 : i32
    %22 = tpu.assume_multiple %21, 2 : i32
    %23 = arith.index_cast %22 : i32 to index
    %c0_14 = arith.constant 0 : index
    %24 = vector.load %arg6[%23, %c0_14] : memref<16x128xf32, #tpu.memory_space<vmem>>, vector<2x128xf32>
    %25 = arith.mulf %10, %18 : vector<2x128xf32>
    %26 = arith.mulf %13, %20 : vector<2x128xf32>
    %27 = arith.subf %25, %26 : vector<2x128xf32>
    %28 = arith.addf %27, %24 : vector<2x128xf32>
    %29 = arith.mulf %13, %18 : vector<2x128xf32>
    %30 = arith.mulf %10, %20 : vector<2x128xf32>
    %31 = arith.addf %29, %30 : vector<2x128xf32>
    %32 = arith.mulf %16, %28 : vector<2x128xf32>
    %33 = arith.index_cast %22 : i32 to index
    %c0_15 = arith.constant 0 : index
    %34 = vector.load %arg7[%33, %c0_15] : memref<16x128xf32, #tpu.memory_space<vmem>>, vector<2x128xf32>
    tpu.vector_store %arg7[%33, %c0_15], %32 {strides = array<i32>} : memref<16x128xf32, #tpu.memory_space<vmem>>, vector<2x128xf32>,
    %c1_i32 = arith.constant 1 : i32
    %c2_i32_16 = arith.constant 2 : i32
    %35 = arith.muli %c1_i32, %c2_i32_16 : i32
    %36 = tpu.assume_multiple %35, 2 : i32
    %37 = arith.index_cast %36 : i32 to index
    %c0_17 = arith.constant 0 : index
    %38 = vector.load %arg6[%37, %c0_17] : memref<16x128xf32, #tpu.memory_space<vmem>>, vector<2x128xf32>
    %39 = arith.mulf %10, %28 : vector<2x128xf32>
    %40 = arith.mulf %13, %31 : vector<2x128xf32>
    %41 = arith.subf %39, %40 : vector<2x128xf32>
    %42 = arith.addf %41, %38 : vector<2x128xf32>
    %43 = arith.mulf %13, %28 : vector<2x128xf32>
    %44 = arith.mulf %10, %31 : vector<2x128xf32>
    %45 = arith.addf %43, %44 : vector<2x128xf32>
    %46 = arith.mulf %16, %42 : vector<2x128xf32>
    %47 = arith.index_cast %36 : i32 to index
    %c0_18 = arith.constant 0 : index
    %48 = vector.load %arg7[%47, %c0_18] : memref<16x128xf32, #tpu.memory_space<vmem>>, vector<2x128xf32>
    tpu.vector_store %arg7[%47, %c0_18], %46 {strides = array<i32>} : memref<16x128xf32, #tpu.memory_space<vmem>>, vector<2x128xf32>,
    %c2_i32_19 = arith.constant 2 : i32
    %c2_i32_20 = arith.constant 2 : i32
    %49 = arith.muli %c2_i32_19, %c2_i32_20 : i32
    %50 = tpu.assume_multiple %49, 2 : i32
    %51 = arith.index_cast %50 : i32 to index
    %c0_21 = arith.constant 0 : index
    %52 = vector.load %arg6[%51, %c0_21] : memref<16x128xf32, #tpu.memory_space<vmem>>, vector<2x128xf32>
    %53 = arith.mulf %10, %42 : vector<2x128xf32>
    %54 = arith.mulf %13, %45 : vector<2x128xf32>
    %55 = arith.subf %53, %54 : vector<2x128xf32>
    %56 = arith.addf %55, %52 : vector<2x128xf32>
    %57 = arith.mulf %13, %42 : vector<2x128xf32>
    %58 = arith.mulf %10, %45 : vector<2x128xf32>
    %59 = arith.addf %57, %58 : vector<2x128xf32>
    %60 = arith.mulf %16, %56 : vector<2x128xf32>
    %61 = arith.index_cast %50 : i32 to index
    %c0_22 = arith.constant 0 : index
    %62 = vector.load %arg7[%61, %c0_22] : memref<16x128xf32, #tpu.memory_space<vmem>>, vector<2x128xf32>
    tpu.vector_store %arg7[%61, %c0_22], %60 {strides = array<i32>} : memref<16x128xf32, #tpu.memory_space<vmem>>, vector<2x128xf32>,
    %c3_i32 = arith.constant 3 : i32
    %c2_i32_23 = arith.constant 2 : i32
    %63 = arith.muli %c3_i32, %c2_i32_23 : i32
    %64 = tpu.assume_multiple %63, 2 : i32
    %65 = arith.index_cast %64 : i32 to index
    %c0_24 = arith.constant 0 : index
    %66 = vector.load %arg6[%65, %c0_24] : memref<16x128xf32, #tpu.memory_space<vmem>>, vector<2x128xf32>
    %67 = arith.mulf %10, %56 : vector<2x128xf32>
    %68 = arith.mulf %13, %59 : vector<2x128xf32>
    %69 = arith.subf %67, %68 : vector<2x128xf32>
    %70 = arith.addf %69, %66 : vector<2x128xf32>
    %71 = arith.mulf %13, %56 : vector<2x128xf32>
    %72 = arith.mulf %10, %59 : vector<2x128xf32>
    %73 = arith.addf %71, %72 : vector<2x128xf32>
    %74 = arith.mulf %16, %70 : vector<2x128xf32>
    %75 = arith.index_cast %64 : i32 to index
    %c0_25 = arith.constant 0 : index
    %76 = vector.load %arg7[%75, %c0_25] : memref<16x128xf32, #tpu.memory_space<vmem>>, vector<2x128xf32>
    tpu.vector_store %arg7[%75, %c0_25], %74 {strides = array<i32>} : memref<16x128xf32, #tpu.memory_space<vmem>>, vector<2x128xf32>,
    %c4_i32 = arith.constant 4 : i32
    %c2_i32_26 = arith.constant 2 : i32
    %77 = arith.muli %c4_i32, %c2_i32_26 : i32
    %78 = tpu.assume_multiple %77, 2 : i32
    %79 = arith.index_cast %78 : i32 to index
    %c0_27 = arith.constant 0 : index
    %80 = vector.load %arg6[%79, %c0_27] : memref<16x128xf32, #tpu.memory_space<vmem>>, vector<2x128xf32>
    %81 = arith.mulf %10, %70 : vector<2x128xf32>
    %82 = arith.mulf %13, %73 : vector<2x128xf32>
    %83 = arith.subf %81, %82 : vector<2x128xf32>
    %84 = arith.addf %83, %80 : vector<2x128xf32>
    %85 = arith.mulf %13, %70 : vector<2x128xf32>
    %86 = arith.mulf %10, %73 : vector<2x128xf32>
    %87 = arith.addf %85, %86 : vector<2x128xf32>
    %88 = arith.mulf %16, %84 : vector<2x128xf32>
    %89 = arith.index_cast %78 : i32 to index
    %c0_28 = arith.constant 0 : index
    %90 = vector.load %arg7[%89, %c0_28] : memref<16x128xf32, #tpu.memory_space<vmem>>, vector<2x128xf32>
    tpu.vector_store %arg7[%89, %c0_28], %88 {strides = array<i32>} : memref<16x128xf32, #tpu.memory_space<vmem>>, vector<2x128xf32>,
    %c5_i32 = arith.constant 5 : i32
    %c2_i32_29 = arith.constant 2 : i32
    %91 = arith.muli %c5_i32, %c2_i32_29 : i32
    %92 = tpu.assume_multiple %91, 2 : i32
    %93 = arith.index_cast %92 : i32 to index
    %c0_30 = arith.constant 0 : index
    %94 = vector.load %arg6[%93, %c0_30] : memref<16x128xf32, #tpu.memory_space<vmem>>, vector<2x128xf32>
    %95 = arith.mulf %10, %84 : vector<2x128xf32>
    %96 = arith.mulf %13, %87 : vector<2x128xf32>
    %97 = arith.subf %95, %96 : vector<2x128xf32>
    %98 = arith.addf %97, %94 : vector<2x128xf32>
    %99 = arith.mulf %13, %84 : vector<2x128xf32>
    %100 = arith.mulf %10, %87 : vector<2x128xf32>
    %101 = arith.addf %99, %100 : vector<2x128xf32>
    %102 = arith.mulf %16, %98 : vector<2x128xf32>
    %103 = arith.index_cast %92 : i32 to index
    %c0_31 = arith.constant 0 : index
    %104 = vector.load %arg7[%103, %c0_31] : memref<16x128xf32, #tpu.memory_space<vmem>>, vector<2x128xf32>
    tpu.vector_store %arg7[%103, %c0_31], %102 {strides = array<i32>} : memref<16x128xf32, #tpu.memory_space<vmem>>, vector<2x128xf32>,
    %c6_i32 = arith.constant 6 : i32
    %c2_i32_32 = arith.constant 2 : i32
    %105 = arith.muli %c6_i32, %c2_i32_32 : i32
    %106 = tpu.assume_multiple %105, 2 : i32
    %107 = arith.index_cast %106 : i32 to index
    %c0_33 = arith.constant 0 : index
    %108 = vector.load %arg6[%107, %c0_33] : memref<16x128xf32, #tpu.memory_space<vmem>>, vector<2x128xf32>
    %109 = arith.mulf %10, %98 : vector<2x128xf32>
    %110 = arith.mulf %13, %101 : vector<2x128xf32>
    %111 = arith.subf %109, %110 : vector<2x128xf32>
    %112 = arith.addf %111, %108 : vector<2x128xf32>
    %113 = arith.mulf %13, %98 : vector<2x128xf32>
    %114 = arith.mulf %10, %101 : vector<2x128xf32>
    %115 = arith.addf %113, %114 : vector<2x128xf32>
    %116 = arith.mulf %16, %112 : vector<2x128xf32>
    %117 = arith.index_cast %106 : i32 to index
    %c0_34 = arith.constant 0 : index
    %118 = vector.load %arg7[%117, %c0_34] : memref<16x128xf32, #tpu.memory_space<vmem>>, vector<2x128xf32>
    tpu.vector_store %arg7[%117, %c0_34], %116 {strides = array<i32>} : memref<16x128xf32, #tpu.memory_space<vmem>>, vector<2x128xf32>,
    %c7_i32 = arith.constant 7 : i32
    %c2_i32_35 = arith.constant 2 : i32
    %119 = arith.muli %c7_i32, %c2_i32_35 : i32
    %120 = tpu.assume_multiple %119, 2 : i32
    %121 = arith.index_cast %120 : i32 to index
    %c0_36 = arith.constant 0 : index
    %122 = vector.load %arg6[%121, %c0_36] : memref<16x128xf32, #tpu.memory_space<vmem>>, vector<2x128xf32>
    %123 = arith.mulf %10, %112 : vector<2x128xf32>
    %124 = arith.mulf %13, %115 : vector<2x128xf32>
    %125 = arith.subf %123, %124 : vector<2x128xf32>
    %126 = arith.addf %125, %122 : vector<2x128xf32>
    %127 = arith.mulf %13, %112 : vector<2x128xf32>
    %128 = arith.mulf %10, %115 : vector<2x128xf32>
    %129 = arith.addf %127, %128 : vector<2x128xf32>
    %130 = arith.mulf %16, %126 : vector<2x128xf32>
    %131 = arith.index_cast %120 : i32 to index
    %c0_37 = arith.constant 0 : index
    %132 = vector.load %arg7[%131, %c0_37] : memref<16x128xf32, #tpu.memory_space<vmem>>, vector<2x128xf32>
    tpu.vector_store %arg7[%131, %c0_37], %130 {strides = array<i32>} : memref<16x128xf32, #tpu.memory_space<vmem>>, vector<2x128xf32>,
    %c8_i32 = arith.constant 8 : i32
    %c0_38 = arith.constant 0 : index
    %c0_39 = arith.constant 0 : index
    %c0_40 = arith.constant 0 : index
    %133 = vector.load %arg8[%c0_38, %c0_39, %c0_40] : memref<2x2x128xf32, #tpu.memory_space<vmem>>, vector<1x2x128xf32>
    %134 = vector.shape_cast %133 : vector<1x2x128xf32> to vector<2x128xf32>
    %135 = vector.shape_cast %126 : vector<2x128xf32> to vector<1x2x128xf32>
    tpu.vector_store %arg8[%c0_38, %c0_39, %c0_40], %135 {strides = array<i32>} : memref<2x2x128xf32, #tpu.memory_space<vmem>>, vector<1x2x128xf32>,
    %c1_41 = arith.constant 1 : index
    %c0_42 = arith.constant 0 : index
    %c0_43 = arith.constant 0 : index
    %136 = vector.load %arg8[%c1_41, %c0_42, %c0_43] : memref<2x2x128xf32, #tpu.memory_space<vmem>>, vector<1x2x128xf32>
    %137 = vector.shape_cast %136 : vector<1x2x128xf32> to vector<2x128xf32>
    %138 = vector.shape_cast %129 : vector<2x128xf32> to vector<1x2x128xf32>
    tpu.vector_store %arg8[%c1_41, %c0_42, %c0_43], %138 {strides = array<i32>} : memref<2x2x128xf32, #tpu.memory_space<vmem>>, vector<1x2x128xf32>,
    %c0_44 = arith.constant 0 : index
    %c0_45 = arith.constant 0 : index
    %139 = vector.load %arg7[%c0_44, %c0_45] : memref<16x128xf32, #tpu.memory_space<vmem>>, vector<16x128xf32>
    %140 = arith.truncf %139 : vector<16x128xf32> to vector<16x128xbf16>
    %c0_46 = arith.constant 0 : index
    %c0_47 = arith.constant 0 : index
    %141 = vector.load %arg3[%c0_46, %c0_47] : memref<128x128xbf16, #tpu.memory_space<vmem>>, vector<128x128xbf16>
    %cst_48 = arith.constant dense<0.000000e+00> : vector<16x128xf32>
    %142 = tpu.matmul %140, %141, %cst_48 {dimension_numbers = #tpu.dot_dimension_numbers<[1], [0], [0], [1], [0, 0, 1, 1], [], []>} : vector<16x128xbf16>, vector<128x128xbf16>, vector<16x128xf32> -> vector<16x128xf32>
    %c0_49 = arith.constant 0 : index
    %c0_50 = arith.constant 0 : index
    %143 = vector.load %arg5[%c0_49, %c0_50] : memref<16x128xf32, #tpu.memory_space<vmem>>, vector<16x128xf32>
    tpu.vector_store %arg5[%c0_49, %c0_50], %142 {strides = array<i32>} : memref<16x128xf32, #tpu.memory_space<vmem>>, vector<16x128xf32>,
    return
  }
  func.func @transform_0(%arg0: i32) -> (i32, i32) {
    %c0_i32 = arith.constant 0 : i32
    %c0_i32_0 = arith.constant 0 : i32
    return %arg0, %c0_i32 : i32, i32
  }
  func.func @transform_1(%arg0: i32) -> (i32, i32) {
    %c0_i32 = arith.constant 0 : i32
    %c0_i32_0 = arith.constant 0 : i32
    %c0_i32_1 = arith.constant 0 : i32
    return %c0_i32, %c0_i32_0 : i32, i32
  }
  func.func @transform_2(%arg0: i32) -> (i32, i32) {
    %c0_i32 = arith.constant 0 : i32
    %c0_i32_0 = arith.constant 0 : i32
    %c0_i32_1 = arith.constant 0 : i32
    return %c0_i32, %c0_i32_0 : i32, i32
  }
  func.func @transform_3(%arg0: i32) -> (i32, i32) {
    %c0_i32 = arith.constant 0 : i32
    %c0_i32_0 = arith.constant 0 : i32
    %c0_i32_1 = arith.constant 0 : i32
    return %c0_i32, %c0_i32_0 : i32, i32
  }
  func.func @transform_4(%arg0: i32) -> (i32, i32) {
    %c0_i32 = arith.constant 0 : i32
    %c0_i32_0 = arith.constant 0 : i32
    return %arg0, %c0_i32 : i32, i32
  }
}

</mosaic_0001>

<llo_original>
// kernel: tpu_custom_call.1
$region0: #{tpu_custom_call.1}
  #allocation0 [shape = 'u32[]', space=smem, size = 0x4, offset = 0x4, fixed_abs, tag = 'smem constant byte address 0x4 - core index']
  #allocation1 [shape = 'u32[72,128]{1,0:T(1,128)}', space=vmem, size = 0x9000, scoped, tag = 'internal scratch']
  #allocation2 [shape = 'f32[16,128]{1,0:T(8,128)}', space=vmem, size = 0x2000, scoped, tag = 'scratch operand']
  #allocation3 [shape = 'f32[16,128]{1,0:T(8,128)}', space=vmem, size = 0x2000, scoped, tag = 'scratch operand']
  #allocation4 [shape = 'f32[2,2,128]{2,1,0:T(2,128)}', space=vmem, size = 0x800, scoped, tag = 'scratch operand']
  %s0 = inlined_call_operand.hbm [shape: bf16[16,128], index: 0, kind: input, shape index: {}]
  %s1 = inlined_call_operand.hbm [shape: bf16[128,128], index: 1, kind: input, shape index: {}]
  %s2 = inlined_call_operand.hbm [shape: bf16[128,128], index: 2, kind: input, shape index: {}]
  %s3 = inlined_call_operand.hbm [shape: f32[3,128], index: 3, kind: input, shape index: {}]
  %s4 = inlined_call_operand.hbm [shape: f32[16,128], index: 4, kind: output, shape index: {}]
  %s5 = sld [smem:[#allocation0]]
  $region46: #{tpu_custom_call.1} parent=0
    _
  %s7 = ssub.s32 1, %s5
  %s8 = scalar_select 0, %s7, %s5
  $region1: #{tpu_custom_call.1} parent=0
    #allocation5 [shape = 'u8[4096]{0}', space=vmem, size = 0x1000, scoped, tag = 'input window, operand 0, single buffered']
    #allocation6 [shape = 's32[1]{0}', space=sflag, size = 0x4, scoped, tag = 'scoped memory for tpu_custom_call.1']
    #allocation7 [shape = 's32[1]{0}', space=sflag, size = 0x4, scoped, tag = 'scoped memory for tpu_custom_call.1']
    #allocation8 [shape = 'u8[32768]{0}', space=vmem, size = 0x8000, scoped, tag = 'input window, operand 1, single buffered']
    #allocation9 [shape = 's32[1]{0}', space=sflag, size = 0x4, scoped, tag = 'scoped memory for tpu_custom_call.1']
    #allocation10 [shape = 'u8[32768]{0}', space=vmem, size = 0x8000, scoped, tag = 'input window, operand 2, single buffered']
    #allocation11 [shape = 'u8[2048]{0}', space=vmem, size = 0x800, scoped, tag = 'input window, operand 3, single buffered']
    #allocation12 [shape = 's32[1]{0}', space=sflag, size = 0x4, scoped, tag = 'scoped memory for tpu_custom_call.1']
    #allocation13 [shape = 'u8[8192]{0}', space=vmem, size = 0x2000, scoped, tag = 'output window, operand 0, single buffered']
    %9 = vsyncpa [#allocation6], 0
    %10 = vsyncpa [#allocation9], 0
    %11 = vsyncpa [#allocation12], 0
    %12 = vsyncpa [#allocation7], 0
    // Predicated region
    $region2: #{tpu_custom_call.1} parent=1 // pred_check
      _
    $region3: #{tpu_custom_call.1} parent=1 // pred_check_branch
      %14 = sbr.rel (0) target = $region5
    $region4: #{tpu_custom_call.1} parent=1 // pred_region
      %16 = vsyncadd [#allocation6], 0
      %s17 = sshll.u32 %s0, 4
      %s18 = int_to_ptr.hbm [resolvable:$true] %s17
      %s19 = sshll.u32 [#allocation5], 4
      %s20 = int_to_ptr.vmem [resolvable:$true] %s19
      %25 = dma.hbm_to_vmem [thread:$0]  %s18, 128, %s20, [#allocation6], 64, 64, 4
    $region5: #{tpu_custom_call.1} parent=1 // pred_fallthru
      _
    // Predicated region
    $region6: #{tpu_custom_call.1} parent=1 // pred_check
      _
    $region7: #{tpu_custom_call.1} parent=1 // pred_check_branch
      %27 = sbr.rel (0) target = $region9
    $region8: #{tpu_custom_call.1} parent=1 // pred_region
      %29 = vsyncadd [#allocation9], 0
      %s30 = sshll.u32 %s1, 4
      %s31 = int_to_ptr.hbm [resolvable:$true] %s30
      %s32 = sshll.u32 [#allocation8], 4
      %s33 = int_to_ptr.vmem [resolvable:$true] %s32
      %38 = dma.hbm_to_vmem [thread:$0]  %s31, 1024, %s33, [#allocation9], 64, 64, 4
    $region9: #{tpu_custom_call.1} parent=1 // pred_fallthru
      _
    // Predicated region
    $region10: #{tpu_custom_call.1} parent=1 // pred_check
      _
    $region11: #{tpu_custom_call.1} parent=1 // pred_check_branch
      %40 = sbr.rel (0) target = $region13
    $region12: #{tpu_custom_call.1} parent=1 // pred_region
      %42 = vsyncadd [#allocation9], 0
      %s43 = sshll.u32 %s2, 4
      %s44 = int_to_ptr.hbm [resolvable:$true] %s43
      %s45 = sshll.u32 [#allocation10], 4
      %s46 = int_to_ptr.vmem [resolvable:$true] %s45
      %51 = dma.hbm_to_vmem [thread:$0]  %s44, 1024, %s46, [#allocation9], 64, 64, 4
    $region13: #{tpu_custom_call.1} parent=1 // pred_fallthru
      _
    // Predicated region
    $region14: #{tpu_custom_call.1} parent=1 // pred_check
      _
    $region15: #{tpu_custom_call.1} parent=1 // pred_check_branch
      %53 = sbr.rel (0) target = $region17
    $region16: #{tpu_custom_call.1} parent=1 // pred_region
      %55 = vsyncadd [#allocation12], 0
      %s57 = sshll.u32 %s3, 4
      %s58 = int_to_ptr.hbm [resolvable:$true] %s57
      %s59 = sshll.u32 [#allocation11], 4
      %s60 = int_to_ptr.vmem [resolvable:$true] %s59
      %62 = dma.hbm_to_vmem [thread:$0]  %s58, 64, %s60, [#allocation12]
    $region17: #{tpu_custom_call.1} parent=1 // pred_fallthru
      _
    // Predicated region
    $region18: #{tpu_custom_call.1} parent=1 // pred_check
      _
    $region19: #{tpu_custom_call.1} parent=1 // pred_check_branch
      %64 = sbr.rel (0) target = $region21
    $region20: #{tpu_custom_call.1} parent=1 // pred_region
      %66 = dma.done [#allocation6], 128
    $region21: #{tpu_custom_call.1} parent=1 // pred_fallthru
      _
    // Predicated region
    $region22: #{tpu_custom_call.1} parent=1 // pred_check
      _
    $region23: #{tpu_custom_call.1} parent=1 // pred_check_branch
      %68 = sbr.rel (0) target = $region25
    $region24: #{tpu_custom_call.1} parent=1 // pred_region
      %70 = dma.done [#allocation9], 1024
    $region25: #{tpu_custom_call.1} parent=1 // pred_fallthru
      _
    // Predicated region
    $region26: #{tpu_custom_call.1} parent=1 // pred_check
      _
    $region27: #{tpu_custom_call.1} parent=1 // pred_check_branch
      %72 = sbr.rel (0) target = $region29
    $region28: #{tpu_custom_call.1} parent=1 // pred_region
      %74 = dma.done [#allocation9], 1024
    $region29: #{tpu_custom_call.1} parent=1 // pred_fallthru
      _
    // Predicated region
    $region30: #{tpu_custom_call.1} parent=1 // pred_check
      _
    $region31: #{tpu_custom_call.1} parent=1 // pred_check_branch
      %76 = sbr.rel (0) target = $region33
    $region32: #{tpu_custom_call.1} parent=1 // pred_region
      %78 = dma.done [#allocation12], 64
    $region33: #{tpu_custom_call.1} parent=1 // pred_fallthru
      _
    %p79 = scmp.eq.s32.totalorder 0, 0
    // Predicated region
    $region34: #{tpu_custom_call.1} parent=1 // pred_check
      %p80 = pneg %p79
    $region35: #{tpu_custom_call.1} parent=1 // pred_check_branch
      %82 = sbr.rel (%p80) target = $region37
    $region36: #{tpu_custom_call.1} parent=1 // pred_region
      %83 = vst [vmem:[#allocation4] sm:$0x3] 0.0
      %84 = vst [vmem:[#allocation4 + $0x2] sm:$0x3] 0.0
    $region37: #{tpu_custom_call.1} parent=1 // pred_fallthru
      _
    %v85 = vld [vmem:[#allocation5] sm:$0xf]
    %v86 = vld [vmem:[#allocation5 + $0x4] sm:$0xf]
    %v87 = vld [vmem:[#allocation8] sm:$0xf]
    %v88 = vld [vmem:[#allocation8 + $0x4] sm:$0xf]
    %v89 = vld [vmem:[#allocation8 + $0x8] sm:$0xf]
    %v90 = vld [vmem:[#allocation8 + $0xc] sm:$0xf]
    %v91 = vld [vmem:[#allocation8 + $0x10] sm:$0xf]
    %v92 = vld [vmem:[#allocation8 + $0x14] sm:$0xf]
    %v93 = vld [vmem:[#allocation8 + $0x18] sm:$0xf]
    %v94 = vld [vmem:[#allocation8 + $0x1c] sm:$0xf]
    %v95 = vld [vmem:[#allocation8 + $0x20] sm:$0xf]
    %v96 = vld [vmem:[#allocation8 + $0x24] sm:$0xf]
    %v97 = vld [vmem:[#allocation8 + $0x28] sm:$0xf]
    %v98 = vld [vmem:[#allocation8 + $0x2c] sm:$0xf]
    %v99 = vld [vmem:[#allocation8 + $0x30] sm:$0xf]
    %v100 = vld [vmem:[#allocation8 + $0x34] sm:$0xf]
    %v101 = vld [vmem:[#allocation8 + $0x38] sm:$0xf]
    %v102 = vld [vmem:[#allocation8 + $0x3c] sm:$0xf]
    %v105 = vunpack.c.l.b16 %v85
    %v106 = vunpack.c.l.b16 %v86
    %v107 = vpack.c.b16 %v106, %v105
    %v125 = vunpack.c.l.b16 %v87
    %v126 = vunpack.c.l.b16 %v88
    %v127 = vunpack.c.l.b16 %v89
    %v128 = vunpack.c.l.b16 %v90
    %v129 = vunpack.c.l.b16 %v91
    %v130 = vunpack.c.l.b16 %v92
    %v131 = vunpack.c.l.b16 %v93
    %v132 = vunpack.c.l.b16 %v94
    %v133 = vunpack.c.l.b16 %v95
    %v134 = vunpack.c.l.b16 %v96
    %v135 = vunpack.c.l.b16 %v97
    %v136 = vunpack.c.l.b16 %v98
    %v137 = vunpack.c.l.b16 %v99
    %v138 = vunpack.c.l.b16 %v100
    %v139 = vunpack.c.l.b16 %v101
    %v140 = vunpack.c.l.b16 %v102
    %v141 = vpack.c.b16 %v126, %v125
    %v142 = vpack.c.b16 %v128, %v127
    %v143 = vpack.c.b16 %v130, %v129
    %v144 = vpack.c.b16 %v132, %v131
    %v145 = vpack.c.b16 %v134, %v133
    %v146 = vpack.c.b16 %v136, %v135
    %v147 = vpack.c.b16 %v138, %v137
    %v148 = vpack.c.b16 %v140, %v139
    %157 = vmatpush.bf16.msra.mxu0 %v148
    %158 = vmatpush.bf16.msra.mxu0 %v147
    %159 = vmatpush.bf16.msra.mxu0 %v146
    %160 = vmatpush.bf16.msra.mxu0 %v145
    %161 = vmatpush.bf16.msra.mxu0 %v144
    %162 = vmatpush.bf16.msra.mxu0 %v143
    %163 = vmatpush.bf16.msra.mxu0 %v142
    %164 = vmatpush.bf16.msra.mxu0 %v141
    %165 = vmatmul.bf16.gmra.mxu0 %v107
    %v166 = vpop.f32.mrf.mxu0
    %v167 = vadd.f32 0.0, %v166
    %v168 = vpop.f32.mrf.mxu0
    %v169 = vadd.f32 0.0, %v168
    %170 = vdwg.mxu0
    %171 = vst [vmem:[#allocation2] sm:$0xff] %v167
    %172 = vst [vmem:[#allocation2 + $0x8] sm:$0xff] %v169
    %v173 = vld [vmem:[#allocation11] sm:$0x7]
    %v174 = vperm.slane %v173, 0
    %v175 = vperm.slane %v173, 1
    %v176 = vperm.slane %v173, 2
    %v177 = vld [vmem:[#allocation4] sm:$0x3]
    %s178 = scalar_lea.vmem [#allocation4], 2
    %v179 = vld [vmem:[%s178] sm:$0x3]
    %v180 = vld [vmem:[#allocation2] sm:$0x3]
    %v181 = vmul.f32 %v174, %v177
    %v182 = vmul.f32 %v175, %v179
    %v183 = vsub.f32 %v181, %v182
    %v184 = vadd.f32 %v183, %v180
    %v185 = vmul.f32 %v175, %v177
    %v186 = vmul.f32 %v174, %v179
    %v187 = vadd.f32 %v185, %v186
    %v188 = vmul.f32 %v176, %v184
    %189 = vst [vmem:[#allocation3] sm:$0x3] %v188
    %s190 = scalar_lea.vmem [#allocation2], 2
    %v191 = vld [vmem:[%s190] sm:$0x3]
    %v192 = vmul.f32 %v174, %v184
    %v193 = vmul.f32 %v175, %v187
    %v194 = vsub.f32 %v192, %v193
    %v195 = vadd.f32 %v194, %v191
    %v196 = vmul.f32 %v175, %v184
    %v197 = vmul.f32 %v174, %v187
    %v198 = vadd.f32 %v196, %v197
    %v199 = vmul.f32 %v176, %v195
    %s200 = scalar_lea.vmem [#allocation3], 2
    %201 = vst [vmem:[%s200] sm:$0x3] %v199
    %s202 = scalar_lea.vmem [#allocation2], 4
    %v203 = vld [vmem:[%s202] sm:$0x3]
    %v204 = vmul.f32 %v174, %v195
    %v205 = vmul.f32 %v175, %v198
    %v206 = vsub.f32 %v204, %v205
    %v207 = vadd.f32 %v206, %v203
    %v208 = vmul.f32 %v175, %v195
    %v209 = vmul.f32 %v174, %v198
    %v210 = vadd.f32 %v208, %v209
    %v211 = vmul.f32 %v176, %v207
    %s212 = scalar_lea.vmem [#allocation3], 4
    %213 = vst [vmem:[%s212] sm:$0x3] %v211
    %s214 = scalar_lea.vmem [#allocation2], 6
    %v215 = vld [vmem:[%s214] sm:$0x3]
    %v216 = vmul.f32 %v174, %v207
    %v217 = vmul.f32 %v175, %v210
    %v218 = vsub.f32 %v216, %v217
    %v219 = vadd.f32 %v218, %v215
    %v220 = vmul.f32 %v175, %v207
    %v221 = vmul.f32 %v174, %v210
    %v222 = vadd.f32 %v220, %v221
    %v223 = vmul.f32 %v176, %v219
    %s224 = scalar_lea.vmem [#allocation3], 6
    %225 = vst [vmem:[%s224] sm:$0x3] %v223
    %s226 = scalar_lea.vmem [#allocation2], 8
    %v227 = vld [vmem:[%s226] sm:$0x3]
    %v228 = vmul.f32 %v174, %v219
    %v229 = vmul.f32 %v175, %v222
    %v230 = vsub.f32 %v228, %v229
    %v231 = vadd.f32 %v230, %v227
    %v232 = vmul.f32 %v175, %v219
    %v233 = vmul.f32 %v174, %v222
    %v234 = vadd.f32 %v232, %v233
    %v235 = vmul.f32 %v176, %v231
    %s236 = scalar_lea.vmem [#allocation3], 8
    %237 = vst [vmem:[%s236] sm:$0x3] %v235
    %s238 = scalar_lea.vmem [#allocation2], 10
    %v239 = vld [vmem:[%s238] sm:$0x3]
    %v240 = vmul.f32 %v174, %v231
    %v241 = vmul.f32 %v175, %v234
    %v242 = vsub.f32 %v240, %v241
    %v243 = vadd.f32 %v242, %v239
    %v244 = vmul.f32 %v175, %v231
    %v245 = vmul.f32 %v174, %v234
    %v246 = vadd.f32 %v244, %v245
    %v247 = vmul.f32 %v176, %v243
    %s248 = scalar_lea.vmem [#allocation3], 10
    %249 = vst [vmem:[%s248] sm:$0x3] %v247
    %s250 = scalar_lea.vmem [#allocation2], 12
    %v251 = vld [vmem:[%s250] sm:$0x3]
    %v252 = vmul.f32 %v174, %v243
    %v253 = vmul.f32 %v175, %v246
    %v254 = vsub.f32 %v252, %v253
    %v255 = vadd.f32 %v254, %v251
    %v256 = vmul.f32 %v175, %v243
    %v257 = vmul.f32 %v174, %v246
    %v258 = vadd.f32 %v256, %v257
    %v259 = vmul.f32 %v176, %v255
    %s260 = scalar_lea.vmem [#allocation3], 12
    %261 = vst [vmem:[%s260] sm:$0x3] %v259
    %s262 = scalar_lea.vmem [#allocation2], 14
    %v263 = vld [vmem:[%s262] sm:$0x3]
    %v264 = vmul.f32 %v174, %v255
    %v265 = vmul.f32 %v175, %v258
    %v266 = vsub.f32 %v264, %v265
    %v267 = vadd.f32 %v266, %v263
    %v268 = vmul.f32 %v175, %v255
    %v269 = vmul.f32 %v174, %v258
    %v270 = vadd.f32 %v268, %v269
    %v271 = vmul.f32 %v176, %v267
    %s272 = scalar_lea.vmem [#allocation3], 14
    %273 = vst [vmem:[%s272] sm:$0x3] %v271
    %274 = vst [vmem:[#allocation4] sm:$0x3] %v267
    %275 = vst [vmem:[%s178] sm:$0x3] %v270
    %v276 = vld [vmem:[#allocation3] sm:$0xff]
    %v277 = vld [vmem:[#allocation3 + $0x8] sm:$0xff]
    %v278 = vpack.c.bf16 %v277, %v276
    %v279 = vld [vmem:[#allocation10] sm:$0xf]
    %v280 = vld [vmem:[#allocation10 + $0x4] sm:$0xf]
    %v281 = vld [vmem:[#allocation10 + $0x8] sm:$0xf]
    %v282 = vld [vmem:[#allocation10 + $0xc] sm:$0xf]
    %v283 = vld [vmem:[#allocation10 + $0x10] sm:$0xf]
    %v284 = vld [vmem:[#allocation10 + $0x14] sm:$0xf]
    %v285 = vld [vmem:[#allocation10 + $0x18] sm:$0xf]
    %v286 = vld [vmem:[#allocation10 + $0x1c] sm:$0xf]
    %v287 = vld [vmem:[#allocation10 + $0x20] sm:$0xf]
    %v288 = vld [vmem:[#allocation10 + $0x24] sm:$0xf]
    %v289 = vld [vmem:[#allocation10 + $0x28] sm:$0xf]
    %v290 = vld [vmem:[#allocation10 + $0x2c] sm:$0xf]
    %v291 = vld [vmem:[#allocation10 + $0x30] sm:$0xf]
    %v292 = vld [vmem:[#allocation10 + $0x34] sm:$0xf]
    %v293 = vld [vmem:[#allocation10 + $0x38] sm:$0xf]
    %v294 = vld [vmem:[#allocation10 + $0x3c] sm:$0xf]
    %v311 = vunpack.c.l.b16 %v279
    %v312 = vunpack.c.l.b16 %v280
    %v313 = vunpack.c.l.b16 %v281
    %v314 = vunpack.c.l.b16 %v282
    %v315 = vunpack.c.l.b16 %v283
    %v316 = vunpack.c.l.b16 %v284
    %v317 = vunpack.c.l.b16 %v285
    %v318 = vunpack.c.l.b16 %v286
    %v319 = vunpack.c.l.b16 %v287
    %v320 = vunpack.c.l.b16 %v288
    %v321 = vunpack.c.l.b16 %v289
    %v322 = vunpack.c.l.b16 %v290
    %v323 = vunpack.c.l.b16 %v291
    %v324 = vunpack.c.l.b16 %v292
    %v325 = vunpack.c.l.b16 %v293
    %v326 = vunpack.c.l.b16 %v294
    %v327 = vpack.c.b16 %v312, %v311
    %v328 = vpack.c.b16 %v314, %v313
    %v329 = vpack.c.b16 %v316, %v315
    %v330 = vpack.c.b16 %v318, %v317
    %v331 = vpack.c.b16 %v320, %v319
    %v332 = vpack.c.b16 %v322, %v321
    %v333 = vpack.c.b16 %v324, %v323
    %v334 = vpack.c.b16 %v326, %v325
    %343 = vmatpush.bf16.msra.mxu0 %v334
    %344 = vmatpush.bf16.msra.mxu0 %v333
    %345 = vmatpush.bf16.msra.mxu0 %v332
    %346 = vmatpush.bf16.msra.mxu0 %v331
    %347 = vmatpush.bf16.msra.mxu0 %v330
    %348 = vmatpush.bf16.msra.mxu0 %v329
    %349 = vmatpush.bf16.msra.mxu0 %v328
    %350 = vmatpush.bf16.msra.mxu0 %v327
    %351 = vmatmul.bf16.gmra.mxu0 %v278
    %v352 = vpop.f32.mrf.mxu0
    %v353 = vadd.f32 0.0, %v352
    %v354 = vpop.f32.mrf.mxu0
    %v355 = vadd.f32 0.0, %v354
    %356 = vdwg.mxu0
    %357 = vst [vmem:[#allocation13] sm:$0xff] %v353
    %358 = vst [vmem:[#allocation13 + $0x8] sm:$0xff] %v355
    // Predicated region
    $region38: #{tpu_custom_call.1} parent=1 // pred_check
      _
    $region39: #{tpu_custom_call.1} parent=1 // pred_check_branch
      %360 = sbr.rel (0) target = $region41
    $region40: #{tpu_custom_call.1} parent=1 // pred_region
      %362 = vsyncadd [#allocation7], 0
      %s363 = sshll.u32 [#allocation13], 4
      %s364 = int_to_ptr.vmem [resolvable:$true] %s363
      %s365 = sshll.u32 %s4, 4
      %s366 = int_to_ptr.hbm [resolvable:$true] %s365
      %371 = dma.vmem_to_hbm [thread:$0]  %s364, 256, %s366, [#allocation7], 128, 128, 8
    $region41: #{tpu_custom_call.1} parent=1 // pred_fallthru
      _
    // Predicated region
    $region42: #{tpu_custom_call.1} parent=1 // pred_check
      _
    $region43: #{tpu_custom_call.1} parent=1 // pred_check_branch
      %373 = sbr.rel (0) target = $region45
    $region44: #{tpu_custom_call.1} parent=1 // pred_region
      %375 = dma.done [#allocation7], 256
    $region45: #{tpu_custom_call.1} parent=1 // pred_fallthru
      _
    %376 = vsyncpa [#allocation6], 1
    %377 = vsyncpa [#allocation9], 1
    %378 = vsyncpa [#allocation12], 1
    %379 = vsyncpa [#allocation7], 1

</llo_original>
